<compile_context>
chip_gen: v7x
topology: tpu7x:2x2x1
jax: 0.10.0
libtpu: 0.0.40
codegen_flags: <defaults>
</compile_context>

<pallas_src>
import jax
import jax.numpy as jnp
from jax.experimental import pallas as pl
from jax.experimental.pallas import tpu as pltpu

# ----------------------- synthetic (small) configuration -----------------------
INP_LEN = 16       # inp_len   (50/100 in the script)
EMBED_DIM = 32     # embed_dim (ESM2 embedding size)
N_FEATS = 27       # n_feats   (Cao features)
NODES = 40         # nodes
NBR_FILTERS = 32   # nbr_filters (120 in the script)
FILTER_LEN = 8     # filter_len


# --------------------------- per-generation plan ---------------------------
_PLAN = None


def _chip_plan():
    """VMEM budget / tile caps derived from the chip (v5e/v6e: 128 MiB, v7x: 64 MiB)."""
    global _PLAN
    if _PLAN is None:
        try:
            phys = int(pltpu.get_tpu_info().vmem_capacity_bytes)
        except Exception:
            phys = 64 << 20
        if phys >= (96 << 20):   # v5e / v6e
            _PLAN = {"vmem_limit": 64 << 20, "d_tile_cap": 8192, "bb_cap": 256}
        else:                    # v7x (64 MiB physical VMEM)
            _PLAN = {"vmem_limit": 48 << 20, "d_tile_cap": 4096, "bb_cap": 128}
    return _PLAN


def _head_tiling(d_total):
    """(d_tile, d_pad): whole slab if small, else a fixed 128-multiple tile + zero-row pad."""
    cap = _chip_plan()["d_tile_cap"]
    if d_total <= cap:
        return d_total, d_total          # one D step; block dim == full dim (always legal)
    d_tile = cap                          # multiple of 128
    return d_tile, pl.cdiv(d_total, d_tile) * d_tile


# --------------------------- parameter preparation (one-time) ---------------------------
def prepare_head_params(fc_w, fc_b, out_w, out_b, seq_len):
    """Fold permute+flatten+slice+concat into the fc weight (bf16, no lane padding).

    PyTorch column j = e*L + l of fc_w multiplies rep[:, 1+l, e]; we build
    w_rep[s*E + e, n] = fc_w[n, e*L + (s-1)] for s in 1..L (zero rows for BOS/EOS and the
    D padding) so the kernel contracts directly against representations.reshape(B, S*E).
    """
    nodes, d_in = fc_w.shape
    L, E, F, S = INP_LEN, EMBED_DIM, N_FEATS, seq_len
    assert d_in == L * E + F and nodes == NODES
    D = S * E
    d_tile, d_pad = _head_tiling(D)
    w_rep_core = fc_w[:, :L * E].reshape(nodes, E, L)            # [n, e, l]
    w_rep_core = jnp.transpose(w_rep_core, (2, 1, 0)).reshape(L * E, nodes)   # row = l*E + e
    w_rep = jnp.zeros((d_pad, nodes), jnp.float32)
    w_rep = w_rep.at[E:E * (L + 1), :].set(w_rep_core)           # tokens 1..L; rest stays zero
    w_rep = w_rep.astype(jnp.bfloat16)                           # halves the dominant HBM stream
    w_feat = fc_w[:, L * E:].T.astype(jnp.float32)               # (F, nodes)
    b_fc = fc_b.reshape(1, nodes).astype(jnp.float32)
    w_out = out_w.reshape(1, nodes).astype(jnp.float32)
    b_out = out_b.reshape(1, 1).astype(jnp.float32)
    return {"w_rep": w_rep, "w_feat": w_feat, "b_fc": b_fc, "w_out": w_out,
            "b_out": b_out, "d_tile": d_tile, "d_in": D}


def prepare_conv_params(w, b):
    """One-time prep: (Cout, Cin, K) torch layout -> per-tap (K, Cin, Cout); bias -> (1, Cout)."""
    w_taps = jnp.transpose(w, (2, 1, 0)).astype(jnp.float32)     # [k, cin, cout]
    return {"w": w_taps, "b": b.reshape(1, -1).astype(jnp.float32)}


# --------------------------- head: fc -> ReLU -> output (fused) ---------------------------
def _head_kernel(rep_ref, feat_ref, wr_ref, wf_ref, bfc_ref, wout_ref, bout_ref,
                 o_ref, acc_ref):
    # rep_ref: (bb, d_tile) f32; feat_ref: (bb, F); wr_ref: (d_tile, NODES) bf16
    # wf_ref: (F, NODES); bfc/wout: (1, NODES); bout: (1, 1); o_ref: (bb, 1)
    # acc_ref: (bb, NODES) f32 accumulator across the D ("arbitrary") grid axis.
    d = pl.program_id(1)

    @pl.when(d == 0)
    def _():
        acc_ref[...] = (jnp.dot(feat_ref[...], wf_ref[...],
                                preferred_element_type=jnp.float32) + bfc_ref[...])

    rep = rep_ref[...]
    acc_ref[...] += jnp.dot(rep, wr_ref[...].astype(rep.dtype),
                            preferred_element_type=jnp.float32)

    @pl.when(d == pl.num_programs(1) - 1)
    def _():
        h = jnp.maximum(acc_ref[...], 0.0)          # relu; dropout3 identity in eval mode
        # nodes->1 output Linear as a VPU/XLU reduction (no 1-lane MXU matmul)
        o_ref[...] = jnp.sum(h * wout_ref[...], axis=-1, keepdims=True) + bout_ref[...]


def head_fc_relu_output(rep_flat, features, hp):
    """o = output(dropout3(relu(fc(cat(flatten(permute(rep)), feat))))) in eval mode."""
    plan = _chip_plan()
    B, D = rep_flat.shape
    F = features.shape[1]
    assert D == hp["d_in"], "rep slab size must match the prepared head params"
    d_tile = hp["d_tile"]
    d_pad = hp["w_rep"].shape[0]
    if d_pad != D:
        # TODO(synk): have the ESM2 backbone emit a d_pad-aligned slab to avoid this copy.
        rep_flat = jnp.pad(rep_flat, ((0, 0), (0, d_pad - D)))
    bb = min(B, plan["bb_cap"])
    b_pad = pl.cdiv(B, bb) * bb
    if b_pad != B:
        rep_flat = jnp.pad(rep_flat, ((0, b_pad - B), (0, 0)))
        features = jnp.pad(features, ((0, b_pad - B), (0, 0)))
    grid = (b_pad // bb, d_pad // d_tile)
    # TODO(synk): on v7x, when b_pad // bb == 1, split the D ("arbitrary") axis across the two
    #             TensorCores with per-core partial accumulators to keep both cores streaming.
    out = pl.pallas_call(
        _head_kernel,
        out_shape=jax.ShapeDtypeStruct((b_pad, 1), jnp.float32),
        grid=grid,
        in_specs=[
            pl.BlockSpec((bb, d_tile), lambda bi, di: (bi, di)),
            pl.BlockSpec((bb, F), lambda bi, di: (bi, 0)),
            pl.BlockSpec((d_tile, NODES), lambda bi, di: (di, 0)),
            pl.BlockSpec((F, NODES), lambda bi, di: (0, 0)),
            pl.BlockSpec((1, NODES), lambda bi, di: (0, 0)),
            pl.BlockSpec((1, NODES), lambda bi, di: (0, 0)),
            pl.BlockSpec((1, 1), lambda bi, di: (0, 0)),
        ],
        out_specs=pl.BlockSpec((bb, 1), lambda bi, di: (bi, 0)),
        scratch_shapes=[pltpu.VMEM((bb, NODES), jnp.float32)],
        compiler_params=pltpu.CompilerParams(
            dimension_semantics=("parallel", "arbitrary"),
            vmem_limit_bytes=plan["vmem_limit"]),
    )(rep_flat, features, hp["w_rep"], hp["w_feat"], hp["b_fc"], hp["w_out"], hp["b_out"])
    return out[:B]


# ------------------ fused conv1('same')+ReLU -> conv2('same')+ReLU (channels-last) ------------------
def _conv2x_same_relu_kernel(x_ref, w1_ref, b1_ref, w2_ref, b2_ref, o_ref,
                             xpad1_ref, xpad2_ref):
    # x_ref: (bb, L, Cin); w1: (K, Cin, C1); b1: (1, C1); w2: (K, C1, C2); b2: (1, C2)
    # o_ref: (bb, L, C2); xpad{1,2}: (bb, L+K-1, C) padded-input VMEM scratch.
    bb, L, cin = x_ref.shape
    K, _, c1 = w1_ref.shape
    c2 = w2_ref.shape[2]
    pad_left = (K - 1) // 2                      # PyTorch 'same', even kernel: 3 left / 4 right

    # --- conv1 + relu: per-tap MXU accumulation, no im2col scratch ---
    xpad1_ref[...] = jnp.zeros_like(xpad1_ref)
    xpad1_ref[:, pad_left:pad_left + L, :] = x_ref[...]          # one vectorized window store
    acc1 = jnp.zeros((bb * L, c1), jnp.float32)
    for k in range(K):                                           # static unroll, K = 8
        acc1 += jnp.dot(xpad1_ref[:, k:k + L, :].reshape(bb * L, cin), w1_ref[k],
                        preferred_element_type=jnp.float32)
    h1 = jnp.maximum(acc1 + b1_ref[...], 0.0)

    # --- conv2 + relu: intermediate stays in VMEM (no HBM round trip) ---
    xpad2_ref[...] = jnp.zeros_like(xpad2_ref)
    xpad2_ref[:, pad_left:pad_left + L, :] = h1.reshape(bb, L, c1)
    acc2 = jnp.zeros((bb * L, c2), jnp.float32)
    for k in range(K):
        acc2 += jnp.dot(xpad2_ref[:, k:k + L, :].reshape(bb * L, c1), w2_ref[k],
                        preferred_element_type=jnp.float32)
    o_ref[...] = jnp.maximum(acc2 + b2_ref[...], 0.0).reshape(bb, L, c2)


def conv2x_same_relu(x_nlc, cp1, cp2):
    """relu(conv2(relu(conv1(x)))), 'same' padding, channels-last layout (B, L, C)."""
    plan = _chip_plan()
    B, L, cin = x_nlc.shape
    K, _, c1 = cp1["w"].shape
    c2 = cp2["w"].shape[2]
    assert cp2["w"].shape[1] == c1
    lp = L + K - 1
    bb = min(B, 32)
    b_pad = pl.cdiv(B, bb) * bb
    if b_pad != B:
        x_nlc = jnp.pad(x_nlc, ((0, b_pad - B), (0, 0), (0, 0)))
    out = pl.pallas_call(
        _conv2x_same_relu_kernel,
        out_shape=jax.ShapeDtypeStruct((b_pad, L, c2), jnp.float32),
        grid=(b_pad // bb,),
        in_specs=[
            pl.BlockSpec((bb, L, cin), lambda i: (i, 0, 0)),
            pl.BlockSpec((K, cin, c1), lambda i: (0, 0, 0)),
            pl.BlockSpec((1, c1), lambda i: (0, 0)),
            pl.BlockSpec((K, c1, c2), lambda i: (0, 0, 0)),
            pl.BlockSpec((1, c2), lambda i: (0, 0)),
        ],
        out_specs=pl.BlockSpec((bb, L, c2), lambda i: (i, 0, 0)),
        scratch_shapes=[pltpu.VMEM((bb, lp, cin), jnp.float32),
                        pltpu.VMEM((bb, lp, c1), jnp.float32)],
        compiler_params=pltpu.CompilerParams(
            dimension_semantics=("parallel",),
            vmem_limit_bytes=plan["vmem_limit"]),
    )(x_nlc, cp1["w"], cp1["b"], cp2["w"], cp2["b"])
    return out[:B]


# --------------------------------- forward pass ---------------------------------
def cnn_linear_forward(representations, features, head_params):
    """CNN_linear.forward (cnn_layers=0, all norm flags False, eval dropout).

    No transpose / flatten / concat here: the kernel consumes the contiguous (B, S*E) slab
    directly; the permutation / token-slice / feature concat live in the prepared fc weight.
    """
    B, S, E = representations.shape
    rep_flat = representations.reshape(B, S * E)     # contiguous -> free bitcast
    o = head_fc_relu_output(rep_flat, features, head_params)
    return o   # PyTorch returns (o, x_esm2, self.esm2); `o` is the prediction


# ------------------------------------- main --------------------------------------
if __name__ == "__main__":
    key = jax.random.PRNGKey(0)
    keys = jax.random.split(key, 10)
    B = 2
    S = INP_LEN + 2   # BOS + sequence + EOS tokens

    representations = jax.random.normal(keys[0], (B, S, EMBED_DIM), jnp.float32)
    features = jax.random.normal(keys[1], (B, N_FEATS), jnp.float32)

    D_fc = INP_LEN * EMBED_DIM + N_FEATS
    fc_w = 0.05 * jax.random.normal(keys[2], (NODES, D_fc), jnp.float32)
    fc_b = 0.05 * jax.random.normal(keys[3], (NODES,), jnp.float32)
    out_w = 0.05 * jax.random.normal(keys[4], (1, NODES), jnp.float32)
    out_b = 0.05 * jax.random.normal(keys[5], (1,), jnp.float32)
    conv1_w = 0.05 * jax.random.normal(keys[6], (NBR_FILTERS, EMBED_DIM, FILTER_LEN), jnp.float32)
    conv1_b = 0.05 * jax.random.normal(keys[7], (NBR_FILTERS,), jnp.float32)
    conv2_w = 0.05 * jax.random.normal(keys[8], (NBR_FILTERS, NBR_FILTERS, FILTER_LEN), jnp.float32)
    conv2_b = 0.05 * jax.random.normal(keys[9], (NBR_FILTERS,), jnp.float32)

    # one-time parameter prep (permutation / padding / transposes folded into weights)
    head_params = prepare_head_params(fc_w, fc_b, out_w, out_b, seq_len=S)
    conv1_p = prepare_conv_params(conv1_w, conv1_b)
    conv2_p = prepare_conv_params(conv2_w, conv2_b)

    # ---- end-to-end forward (cnn_layers = 0 configuration) ----
    o = jax.block_until_ready(cnn_linear_forward(representations, features, head_params))
    assert o.shape == (B, 1) and o.dtype == jnp.float32

    # pure-jnp reference in the original PyTorch order
    x_o = jnp.transpose(representations[:, 1:INP_LEN + 1, :], (0, 2, 1))   # (B, E, L) NCL
    x_cat = jnp.concatenate([x_o.reshape(B, -1), features], axis=1)
    h_ref = jnp.maximum(
        jnp.dot(x_cat, fc_w.T, precision=jax.lax.Precision.HIGHEST) + fc_b, 0.0)
    o_ref = jnp.dot(h_ref, out_w.T, precision=jax.lax.Precision.HIGHEST) + out_b
    assert jnp.allclose(o, o_ref, atol=1e-2, rtol=1e-2)

    # ---- cnn_layers >= 1 branch: relu(conv2(relu(conv1(x_o)))), fused in one kernel ----
    # Kernel works channels-last, so it consumes the representation slice with NO permute.
    x_nlc = representations[:, 1:INP_LEN + 1, :]                  # (B, L, E)
    c2_nlc = jax.block_until_ready(conv2x_same_relu(x_nlc, conv1_p, conv2_p))   # (B, L, C)
    c2 = jnp.transpose(c2_nlc, (0, 2, 1))                         # back to PyTorch NCL layout

    def conv_ref(x, w, b):
        y = jax.lax.conv_general_dilated(
            x, w, window_strides=(1,),
            padding=[((FILTER_LEN - 1) // 2, (FILTER_LEN - 1) - (FILTER_LEN - 1) // 2)],
            dimension_numbers=("NCH", "OIH", "NCH"),
            precision=jax.lax.Precision.HIGHEST)
        return jnp.maximum(y + b[None, :, None], 0.0)

    c2_ref = conv_ref(conv_ref(x_o, conv1_w, conv1_b), conv2_w, conv2_b)
    assert c2.shape == (B, NBR_FILTERS, INP_LEN)
    assert jnp.allclose(c2, c2_ref, atol=1e-2, rtol=1e-2)

    print("KERNEL_OK")
</pallas_src>

<mosaic_0001>
module attributes {stable_mosaic.version = 11 : i64} {
  func.func @_head_kernel(%arg0: i32, %arg1: i32, %arg2: memref<2x576xf32, #tpu.memory_space<vmem>>, %arg3: memref<2x27xf32, #tpu.memory_space<vmem>>, %arg4: memref<576x40xbf16, #tpu.memory_space<vmem>>, %arg5: memref<27x40xf32, #tpu.memory_space<vmem>>, %arg6: memref<1x40xf32, #tpu.memory_space<vmem>>, %arg7: memref<1x40xf32, #tpu.memory_space<vmem>>, %arg8: memref<1x1xf32, #tpu.memory_space<vmem>>, %arg9: memref<2x1xf32, #tpu.memory_space<vmem>>, %arg10: memref<2x40xf32, #tpu.memory_space<vmem>>) attributes {dimension_semantics = [#tpu.dimension_semantics<parallel>, #tpu.dimension_semantics<arbitrary>], iteration_bounds = array<i64: 1, 1>, scalar_prefetch = 0 : i64, scratch_operands = 1 : i64, tpu.core_type = #tpu.core_type<tc>, window_params = [{transform_indices = @transform_0, window_bounds = array<i64: 2, 576>}, {transform_indices = @transform_1, window_bounds = array<i64: 2, 27>}, {transform_indices = @transform_2, window_bounds = array<i64: 576, 40>}, {pipeline_mode = #tpu.pipeline_mode<synchronous>, transform_indices = @transform_3, window_bounds = array<i64: 27, 40>}, {pipeline_mode = #tpu.pipeline_mode<synchronous>, transform_indices = @transform_4, window_bounds = array<i64: 1, 40>}, {pipeline_mode = #tpu.pipeline_mode<synchronous>, transform_indices = @transform_5, window_bounds = array<i64: 1, 40>}, {pipeline_mode = #tpu.pipeline_mode<synchronous>, transform_indices = @transform_6, window_bounds = array<i64: 1, 1>}, {transform_indices = @transform_7, window_bounds = array<i64: 2, 1>}]} {
    %c0_i32 = arith.constant 0 : i32
    %0 = arith.cmpi eq, %arg1, %c0_i32 : i32
    %1 = arith.extui %0 : i1 to i32
    %c0_i32_0 = arith.constant 0 : i32
    %2 = arith.cmpi ne, %1, %c0_i32_0 : i32
    scf.if %2 {
      %c0_10 = arith.constant 0 : index
      %c0_11 = arith.constant 0 : index
      %13 = vector.load %arg3[%c0_10, %c0_11] : memref<2x27xf32, #tpu.memory_space<vmem>>, vector<2x27xf32>
      %c0_12 = arith.constant 0 : index
      %c0_13 = arith.constant 0 : index
      %14 = vector.load %arg5[%c0_12, %c0_13] : memref<27x40xf32, #tpu.memory_space<vmem>>, vector<27x40xf32>
      %cst_14 = arith.constant dense<0.000000e+00> : vector<2x40xf32>
      %15 = tpu.matmul %13, %14, %cst_14 {dimension_numbers = #tpu.dot_dimension_numbers<[1], [0], [0], [1], [0, 0, 1, 1], [], []>} : vector<2x27xf32>, vector<27x40xf32>, vector<2x40xf32> -> vector<2x40xf32>
      %c0_15 = arith.constant 0 : index
      %c0_16 = arith.constant 0 : index
      %16 = vector.load %arg6[%c0_15, %c0_16] : memref<1x40xf32, #tpu.memory_space<vmem>>, vector<1x40xf32>
      %17 = vector.broadcast %16 : vector<1x40xf32> to vector<2x40xf32>
      %18 = arith.addf %15, %17 : vector<2x40xf32>
      %c0_17 = arith.constant 0 : index
      %c0_18 = arith.constant 0 : index
      %19 = vector.load %arg10[%c0_17, %c0_18] : memref<2x40xf32, #tpu.memory_space<vmem>>, vector<2x40xf32>
      tpu.vector_store %arg10[%c0_17, %c0_18], %18 {strides = array<i32>} : memref<2x40xf32, #tpu.memory_space<vmem>>, vector<2x40xf32>,
    } else {
    }
    %c0 = arith.constant 0 : index
    %c0_1 = arith.constant 0 : index
    %3 = vector.load %arg2[%c0, %c0_1] : memref<2x576xf32, #tpu.memory_space<vmem>>, vector<2x576xf32>
    %c0_2 = arith.constant 0 : index
    %c0_3 = arith.constant 0 : index
    %4 = vector.load %arg10[%c0_2, %c0_3] : memref<2x40xf32, #tpu.memory_space<vmem>>, vector<2x40xf32>
    %c0_4 = arith.constant 0 : index
    %c0_5 = arith.constant 0 : index
    %5 = vector.load %arg4[%c0_4, %c0_5] : memref<576x40xbf16, #tpu.memory_space<vmem>>, vector<576x40xbf16>
    %6 = arith.extf %5 : vector<576x40xbf16> to vector<576x40xf32>
    %cst = arith.constant dense<0.000000e+00> : vector<2x40xf32>
    %7 = tpu.matmul %3, %6, %cst {dimension_numbers = #tpu.dot_dimension_numbers<[1], [0], [0], [1], [0, 0, 1, 1], [], []>} : vector<2x576xf32>, vector<576x40xf32>, vector<2x40xf32> -> vector<2x40xf32>
    %8 = arith.addf %4, %7 : vector<2x40xf32>
    %c0_6 = arith.constant 0 : index
    %c0_7 = arith.constant 0 : index
    %9 = vector.load %arg10[%c0_6, %c0_7] : memref<2x40xf32, #tpu.memory_space<vmem>>, vector<2x40xf32>
    tpu.vector_store %arg10[%c0_6, %c0_7], %8 {strides = array<i32>} : memref<2x40xf32, #tpu.memory_space<vmem>>, vector<2x40xf32>,
    %c0_i32_8 = arith.constant 0 : i32
    %10 = arith.cmpi eq, %arg1, %c0_i32_8 : i32
    %11 = arith.extui %10 : i1 to i32
    %c0_i32_9 = arith.constant 0 : i32
    %12 = arith.cmpi ne, %11, %c0_i32_9 : i32
    scf.if %12 {
      %c0_10 = arith.constant 0 : index
      %c0_11 = arith.constant 0 : index
      %13 = vector.load %arg10[%c0_10, %c0_11] : memref<2x40xf32, #tpu.memory_space<vmem>>, vector<2x40xf32>
      %cst_12 = arith.constant 0.000000e+00 : f32
      %14 = vector.broadcast %cst_12 : f32 to vector<2x40xf32>
      %15 = arith.maximumf %13, %14 : vector<2x40xf32>
      %c0_13 = arith.constant 0 : index
      %c0_14 = arith.constant 0 : index
      %16 = vector.load %arg7[%c0_13, %c0_14] : memref<1x40xf32, #tpu.memory_space<vmem>>, vector<1x40xf32>
      %17 = vector.broadcast %16 : vector<1x40xf32> to vector<2x40xf32>
      %18 = arith.mulf %15, %17 : vector<2x40xf32>
      %cst_15 = arith.constant dense<0.000000e+00> : vector<2xf32>
      %19 = vector.multi_reduction <add>, %18, %cst_15 [1] : vector<2x40xf32> to vector<2xf32>
      %20 = vector.shape_cast %19 : vector<2xf32> to vector<2x1xf32>
      %c0_16 = arith.constant 0 : index
      %c0_17 = arith.constant 0 : index
      %21 = vector.load %arg8[%c0_16, %c0_17] : memref<1x1xf32, #tpu.memory_space<vmem>>, vector<1x1xf32>
      %22 = vector.broadcast %21 : vector<1x1xf32> to vector<2x1xf32>
      %23 = arith.addf %20, %22 : vector<2x1xf32>
      %c0_18 = arith.constant 0 : index
      %c0_19 = arith.constant 0 : index
      %24 = vector.load %arg9[%c0_18, %c0_19] : memref<2x1xf32, #tpu.memory_space<vmem>>, vector<2x1xf32>
      tpu.vector_store %arg9[%c0_18, %c0_19], %23 {strides = array<i32>} : memref<2x1xf32, #tpu.memory_space<vmem>>, vector<2x1xf32>,
    } else {
    }
    return
  }
  func.func @transform_0(%arg0: i32, %arg1: i32) -> (i32, i32) {
    %c0_i32 = arith.constant 0 : i32
    return %arg0, %arg1 : i32, i32
  }
  func.func @transform_1(%arg0: i32, %arg1: i32) -> (i32, i32) {
    %c0_i32 = arith.constant 0 : i32
    %c0_i32_0 = arith.constant 0 : i32
    return %arg0, %c0_i32 : i32, i32
  }
  func.func @transform_2(%arg0: i32, %arg1: i32) -> (i32, i32) {
    %c0_i32 = arith.constant 0 : i32
    %c0_i32_0 = arith.constant 0 : i32
    return %arg1, %c0_i32 : i32, i32
  }
  func.func @transform_3(%arg0: i32, %arg1: i32) -> (i32, i32) {
    %c0_i32 = arith.constant 0 : i32
    %c0_i32_0 = arith.constant 0 : i32
    %c0_i32_1 = arith.constant 0 : i32
    return %c0_i32, %c0_i32_0 : i32, i32
  }
  func.func @transform_4(%arg0: i32, %arg1: i32) -> (i32, i32) {
    %c0_i32 = arith.constant 0 : i32
    %c0_i32_0 = arith.constant 0 : i32
    %c0_i32_1 = arith.constant 0 : i32
    return %c0_i32, %c0_i32_0 : i32, i32
  }
  func.func @transform_5(%arg0: i32, %arg1: i32) -> (i32, i32) {
    %c0_i32 = arith.constant 0 : i32
    %c0_i32_0 = arith.constant 0 : i32
    %c0_i32_1 = arith.constant 0 : i32
    return %c0_i32, %c0_i32_0 : i32, i32
  }
  func.func @transform_6(%arg0: i32, %arg1: i32) -> (i32, i32) {
    %c0_i32 = arith.constant 0 : i32
    %c0_i32_0 = arith.constant 0 : i32
    %c0_i32_1 = arith.constant 0 : i32
    return %c0_i32, %c0_i32_0 : i32, i32
  }
  func.func @transform_7(%arg0: i32, %arg1: i32) -> (i32, i32) {
    %c0_i32 = arith.constant 0 : i32
    %c0_i32_0 = arith.constant 0 : i32
    return %arg0, %c0_i32 : i32, i32
  }
}

</mosaic_0001>

<llo_original>
// kernel: tpu_custom_call.1
$region0: #{tpu_custom_call.1}
  #allocation0 [shape = 'u32[]', space=smem, size = 0x4, offset = 0x4, fixed_abs, tag = 'smem constant byte address 0x4 - core index']
  #allocation1 [shape = 'u32[144,128]{1,0:T(1,128)}', space=vmem, size = 0x12000, scoped, tag = 'internal scratch']
  #allocation2 [shape = 'f32[2,40]{1,0:T(2,128)}', space=vmem, size = 0x400, scoped, tag = 'scratch operand']
  #allocation3 [shape = 'f32[1,1]{1,0:T(1,128)S(1)}', space=vmem, size = 0x200, scoped, tag = 'scoped memory for tpu_custom_call.1']
  %s0 = inlined_call_operand.vmem [shape: f32[2,576], index: 0, kind: input, shape index: {}]
  %s1 = inlined_call_operand.vmem [shape: f32[2,27], index: 1, kind: input, shape index: {}]
  %s2 = inlined_call_operand.vmem [shape: bf16[576,40], index: 2, kind: input, shape index: {}]
  %s3 = inlined_call_operand.vmem [shape: f32[27,40], index: 3, kind: input, shape index: {}]
  %s4 = inlined_call_operand.vmem [shape: f32[1,40], index: 4, kind: input, shape index: {}]
  %s5 = inlined_call_operand.vmem [shape: f32[1,40], index: 5, kind: input, shape index: {}]
  %s6 = inlined_call_operand.<no memory space> [shape: f32[1,1], index: 6, kind: input, shape index: {}]
  %s7 = inlined_call_operand.vmem [shape: f32[2,1], index: 7, kind: output, shape index: {}]
  %s8 = sld [smem:[#allocation0]]
  $region46: #{tpu_custom_call.1} parent=0
    _
  %s10 = ssub.s32 1, %s8
  %s11 = scalar_select 0, %s10, %s8
  %v12 = vstv %s6
  %13 = vst [vmem:[#allocation3] sm:$0x1] %v12
  // Predicated region
  $region2: #{tpu_custom_call.1} parent=0 // pred_check
    _
  $region3: #{tpu_custom_call.1} parent=0 // pred_check_branch
    %15 = sbr.rel (0) target = $region5
  $region4: #{tpu_custom_call.1} parent=0 // pred_region
    _
  $region5: #{tpu_custom_call.1} parent=0 // pred_fallthru
    _
  // Predicated region
  $region6: #{tpu_custom_call.1} parent=0 // pred_check
    _
  $region7: #{tpu_custom_call.1} parent=0 // pred_check_branch
    %17 = sbr.rel (0) target = $region9
  $region8: #{tpu_custom_call.1} parent=0 // pred_region
    _
  $region9: #{tpu_custom_call.1} parent=0 // pred_fallthru
    _
  // Predicated region
  $region10: #{tpu_custom_call.1} parent=0 // pred_check
    _
  $region11: #{tpu_custom_call.1} parent=0 // pred_check_branch
    %19 = sbr.rel (0) target = $region13
  $region12: #{tpu_custom_call.1} parent=0 // pred_region
    _
  $region13: #{tpu_custom_call.1} parent=0 // pred_fallthru
    _
  // Predicated region
  $region14: #{tpu_custom_call.1} parent=0 // pred_check
    _
  $region15: #{tpu_custom_call.1} parent=0 // pred_check_branch
    %21 = sbr.rel (0) target = $region17
  $region16: #{tpu_custom_call.1} parent=0 // pred_region
    _
  $region17: #{tpu_custom_call.1} parent=0 // pred_fallthru
    _
  // Predicated region
  $region18: #{tpu_custom_call.1} parent=0 // pred_check
    _
  $region19: #{tpu_custom_call.1} parent=0 // pred_check_branch
    %23 = sbr.rel (0) target = $region21
  $region20: #{tpu_custom_call.1} parent=0 // pred_region
    _
  $region21: #{tpu_custom_call.1} parent=0 // pred_fallthru
    _
  // Predicated region
  $region22: #{tpu_custom_call.1} parent=0 // pred_check
    _
  $region23: #{tpu_custom_call.1} parent=0 // pred_check_branch
    %25 = sbr.rel (0) target = $region25
  $region24: #{tpu_custom_call.1} parent=0 // pred_region
    _
  $region25: #{tpu_custom_call.1} parent=0 // pred_fallthru
    _
  // Predicated region
  $region26: #{tpu_custom_call.1} parent=0 // pred_check
    _
  $region27: #{tpu_custom_call.1} parent=0 // pred_check_branch
    %27 = sbr.rel (0) target = $region29
  $region28: #{tpu_custom_call.1} parent=0 // pred_region
    _
  $region29: #{tpu_custom_call.1} parent=0 // pred_fallthru
    _
  %p28 = scmp.eq.s32.totalorder 0, 0
  // Predicated region
  $region30: #{tpu_custom_call.1} parent=0 // pred_check
    %p29 = pneg %p28
  $region31: #{tpu_custom_call.1} parent=0 // pred_check_branch
    %31 = sbr.rel (%p29) target = $region33
  $region32: #{tpu_custom_call.1} parent=0 // pred_region
    %v32 = vld [vmem:[%s1] sm:$0x3]
    %v33 = vld [vmem:[%s3] sm:$0xff]
    %v34 = vld [vmem:[%s3 + $0x8] sm:$0xff]
    %v35 = vld [vmem:[%s3 + $0x10] sm:$0xff]
    %v36 = vld [vmem:[%s3 + $0x18] sm:$0x7]
    %v37 = vld [vmem:[%s4] sm:$0x1]
    %v39 = vlaneseq
    %v40 = vshrl.u32 %v39, 7
    %v41 = vsub.s32 0, %v40
    %v42 = vrot.slane %v37, %v41
    %vm44 = vcmask 220160
    %v46 = vsel %vm44, %v32, 0
    %vm48 = vcmask 1042432
    %v50 = vsel %vm48, %v36, 0
    %52 = vmatprep.subr.mxu0 0.0
    %53 = vmatpush1.msra.mxu0 %v33
    %54 = vmatprep.subr.mxu0 0.0
    %55 = vmatpush1.msra.mxu0 %v34
    %56 = vmatprep.subr.mxu0 0.0
    %57 = vmatpush1.msra.mxu0 %v35
    %58 = vmatprep.subr.mxu0 0.0
    %59 = vmatpush1.msra.mxu0 %v50
    %60 = vmatprep.subr.mxu0 0.0
    %61 = vmatpush1.msra.mxu0 0.0
    %62 = vmatprep.subr.mxu0 0.0
    %63 = vmatpush1.msra.mxu0 0.0
    %64 = vmatprep.subr.mxu0 0.0
    %65 = vmatpush1.msra.mxu0 0.0
    %66 = vmatprep.subr.mxu0 0.0
    %67 = vmatpush1.msra.mxu0 0.0
    %68 = vmatprep.subr.mxu0 0.0
    %69 = vmatpush1.msra.mxu0 0.0
    %70 = vmatprep.subr.mxu0 0.0
    %71 = vmatpush1.msra.mxu0 0.0
    %72 = vmatprep.subr.mxu0 0.0
    %73 = vmatpush1.msra.mxu0 0.0
    %74 = vmatprep.subr.mxu0 0.0
    %75 = vmatpush1.msra.mxu0 0.0
    %76 = vmatprep.subr.mxu0 0.0
    %77 = vmatpush1.msra.mxu0 0.0
    %78 = vmatprep.subr.mxu0 0.0
    %79 = vmatpush1.msra.mxu0 0.0
    %80 = vmatprep.subr.mxu0 0.0
    %81 = vmatpush1.msra.mxu0 0.0
    %82 = vmatprep.subr.mxu0 0.0
    %83 = vmatpush1.msra.mxu0 0.0
    %84 = vmatprep.subr.mxu0 0.0
    %85 = vmatpush1.msra.mxu0 0.0
    %86 = vmatprep.subr.mxu0 0.0
    %87 = vmatpush1.msra.mxu0 0.0
    %88 = vmatprep.subr.mxu0 0.0
    %89 = vmatpush1.msra.mxu0 0.0
    %90 = vmatprep.subr.mxu0 0.0
    %91 = vmatpush1.msra.mxu0 0.0
    %92 = vmatprep.subr.mxu0 0.0
    %93 = vmatpush1.msra.mxu0 0.0
    %94 = vmatprep.subr.mxu0 0.0
    %95 = vmatpush1.msra.mxu0 0.0
    %96 = vmatprep.subr.mxu0 0.0
    %97 = vmatpush1.msra.mxu0 0.0
    %98 = vmatprep.subr.mxu0 0.0
    %99 = vmatpush1.msra.mxu0 0.0
    %100 = vmatprep.subr.mxu0 0.0
    %101 = vmatpush1.msra.mxu0 0.0
    %102 = vmatprep.subr.mxu0 0.0
    %103 = vmatpush1.msra.mxu0 0.0
    %104 = vmatprep.subr.mxu0 0.0
    %105 = vmatpush1.msra.mxu0 0.0
    %106 = vmatprep.subr.mxu0 0.0
    %107 = vmatpush1.msra.mxu0 0.0
    %108 = vmatprep.subr.mxu0 0.0
    %109 = vmatpush1.msra.mxu0 0.0
    %110 = vmatprep.subr.mxu0 0.0
    %111 = vmatpush1.msra.mxu0 0.0
    %112 = vmatprep.subr.mxu0 0.0
    %113 = vmatpush1.msra.mxu0 0.0
    %114 = vmatprep.subr.mxu0 0.0
    %115 = vmatpush1.msra.mxu0 0.0
    %116 = vmatprep.mubr.f32.mxu0 0.0
    %117 = vmatmul.mubr.f32.gmra.mrb[0].mxu0 %v46
    %v118 = vpop.f32.mrb[0].mxu0
    %v119 = vadd.f32 %v42, %v118
    %v120 = vpop.f32.mrb[0].mxu0
    %121 = vdwg.mxu0
    %vm122 = vcmask 320512
    %123 = vst.msk [vmem:[#allocation2] sm:$0x3] %vm122, %v119
  $region33: #{tpu_custom_call.1} parent=0 // pred_fallthru
    _
  %v124 = vld [vmem:[%s0] sm:$0xff]
  %v125 = vld [vmem:[%s0 + $0x8] sm:$0x3]
  %v126 = vld [vmem:[#allocation2] sm:$0x3]
  %v127 = vld [vmem:[%s2] sm:$0xf]
  %v128 = vld [vmem:[%s2 + $0x4] sm:$0xf]
  %v129 = vld [vmem:[%s2 + $0x8] sm:$0xf]
  %v130 = vld [vmem:[%s2 + $0xc] sm:$0xf]
  %v131 = vld [vmem:[%s2 + $0x10] sm:$0xf]
  %v132 = vld [vmem:[%s2 + $0x14] sm:$0xf]
  %v133 = vld [vmem:[%s2 + $0x18] sm:$0xf]
  %v134 = vld [vmem:[%s2 + $0x1c] sm:$0xf]
  %v135 = vld [vmem:[%s2 + $0x20] sm:$0xf]
  %v136 = vld [vmem:[%s2 + $0x24] sm:$0xf]
  %v137 = vld [vmem:[%s2 + $0x28] sm:$0xf]
  %v138 = vld [vmem:[%s2 + $0x2c] sm:$0xf]
  %v139 = vld [vmem:[%s2 + $0x30] sm:$0xf]
  %v140 = vld [vmem:[%s2 + $0x34] sm:$0xf]
  %v141 = vld [vmem:[%s2 + $0x38] sm:$0xf]
  %v142 = vld [vmem:[%s2 + $0x3c] sm:$0xf]
  %v143 = vld [vmem:[%s2 + $0x40] sm:$0xf]
  %v144 = vld [vmem:[%s2 + $0x44] sm:$0xf]
  %v145 = vld [vmem:[%s2 + $0x48] sm:$0xf]
  %v146 = vld [vmem:[%s2 + $0x4c] sm:$0xf]
  %v147 = vld [vmem:[%s2 + $0x50] sm:$0xf]
  %v148 = vld [vmem:[%s2 + $0x54] sm:$0xf]
  %v149 = vld [vmem:[%s2 + $0x58] sm:$0xf]
  %v150 = vld [vmem:[%s2 + $0x5c] sm:$0xf]
  %v151 = vld [vmem:[%s2 + $0x60] sm:$0xf]
  %v152 = vld [vmem:[%s2 + $0x64] sm:$0xf]
  %v153 = vld [vmem:[%s2 + $0x68] sm:$0xf]
  %v154 = vld [vmem:[%s2 + $0x6c] sm:$0xf]
  %v155 = vld [vmem:[%s2 + $0x70] sm:$0xf]
  %v156 = vld [vmem:[%s2 + $0x74] sm:$0xf]
  %v157 = vld [vmem:[%s2 + $0x78] sm:$0xf]
  %v158 = vld [vmem:[%s2 + $0x7c] sm:$0xf]
  %v159 = vld [vmem:[%s2 + $0x80] sm:$0xf]
  %v160 = vld [vmem:[%s2 + $0x84] sm:$0xf]
  %v161 = vld [vmem:[%s2 + $0x88] sm:$0xf]
  %v162 = vld [vmem:[%s2 + $0x8c] sm:$0xf]
  %v163 = vld [vmem:[%s2 + $0x90] sm:$0xf]
  %v164 = vld [vmem:[%s2 + $0x94] sm:$0xf]
  %v165 = vld [vmem:[%s2 + $0x98] sm:$0xf]
  %v166 = vld [vmem:[%s2 + $0x9c] sm:$0xf]
  %v167 = vld [vmem:[%s2 + $0xa0] sm:$0xf]
  %v168 = vld [vmem:[%s2 + $0xa4] sm:$0xf]
  %v169 = vld [vmem:[%s2 + $0xa8] sm:$0xf]
  %v170 = vld [vmem:[%s2 + $0xac] sm:$0xf]
  %v171 = vld [vmem:[%s2 + $0xb0] sm:$0xf]
  %v172 = vld [vmem:[%s2 + $0xb4] sm:$0xf]
  %v173 = vld [vmem:[%s2 + $0xb8] sm:$0xf]
  %v174 = vld [vmem:[%s2 + $0xbc] sm:$0xf]
  %v175 = vld [vmem:[%s2 + $0xc0] sm:$0xf]
  %v176 = vld [vmem:[%s2 + $0xc4] sm:$0xf]
  %v177 = vld [vmem:[%s2 + $0xc8] sm:$0xf]
  %v178 = vld [vmem:[%s2 + $0xcc] sm:$0xf]
  %v179 = vld [vmem:[%s2 + $0xd0] sm:$0xf]
  %v180 = vld [vmem:[%s2 + $0xd4] sm:$0xf]
  %v181 = vld [vmem:[%s2 + $0xd8] sm:$0xf]
  %v182 = vld [vmem:[%s2 + $0xdc] sm:$0xf]
  %v183 = vld [vmem:[%s2 + $0xe0] sm:$0xf]
  %v184 = vld [vmem:[%s2 + $0xe4] sm:$0xf]
  %v185 = vld [vmem:[%s2 + $0xe8] sm:$0xf]
  %v186 = vld [vmem:[%s2 + $0xec] sm:$0xf]
  %v187 = vld [vmem:[%s2 + $0xf0] sm:$0xf]
  %v188 = vld [vmem:[%s2 + $0xf4] sm:$0xf]
  %v189 = vld [vmem:[%s2 + $0xf8] sm:$0xf]
  %v190 = vld [vmem:[%s2 + $0xfc] sm:$0xf]
  %v191 = vld [vmem:[%s2 + $0x100] sm:$0xf]
  %v192 = vld [vmem:[%s2 + $0x104] sm:$0xf]
  %v193 = vld [vmem:[%s2 + $0x108] sm:$0xf]
  %v194 = vld [vmem:[%s2 + $0x10c] sm:$0xf]
  %v195 = vld [vmem:[%s2 + $0x110] sm:$0xf]
  %v196 = vld [vmem:[%s2 + $0x114] sm:$0xf]
  %v197 = vld [vmem:[%s2 + $0x118] sm:$0xf]
  %v198 = vld [vmem:[%s2 + $0x11c] sm:$0xf]
  %v199 = vunpack.c.l.bf16 %v127
  %v200 = vunpack.c.l.bf16 %v128
  %v201 = vunpack.c.l.bf16 %v129
  %v202 = vunpack.c.l.bf16 %v130
  %v203 = vunpack.c.l.bf16 %v131
  %v204 = vunpack.c.l.bf16 %v132
  %v205 = vunpack.c.l.bf16 %v133
  %v206 = vunpack.c.l.bf16 %v134
  %v207 = vunpack.c.l.bf16 %v135
  %v208 = vunpack.c.l.bf16 %v136
  %v209 = vunpack.c.l.bf16 %v137
  %v210 = vunpack.c.l.bf16 %v138
  %v211 = vunpack.c.l.bf16 %v139
  %v212 = vunpack.c.l.bf16 %v140
  %v213 = vunpack.c.l.bf16 %v141
  %v214 = vunpack.c.l.bf16 %v142
  %v215 = vunpack.c.l.bf16 %v143
  %v216 = vunpack.c.l.bf16 %v144
  %v217 = vunpack.c.l.bf16 %v145
  %v218 = vunpack.c.l.bf16 %v146
  %v219 = vunpack.c.l.bf16 %v147
  %v220 = vunpack.c.l.bf16 %v148
  %v221 = vunpack.c.l.bf16 %v149
  %v222 = vunpack.c.l.bf16 %v150
  %v223 = vunpack.c.l.bf16 %v151
  %v224 = vunpack.c.l.bf16 %v152
  %v225 = vunpack.c.l.bf16 %v153
  %v226 = vunpack.c.l.bf16 %v154
  %v227 = vunpack.c.l.bf16 %v155
  %v228 = vunpack.c.l.bf16 %v156
  %v229 = vunpack.c.l.bf16 %v157
  %v230 = vunpack.c.l.bf16 %v158
  %v231 = vunpack.c.l.bf16 %v159
  %v232 = vunpack.c.l.bf16 %v160
  %v233 = vunpack.c.l.bf16 %v161
  %v234 = vunpack.c.l.bf16 %v162
  %v235 = vunpack.c.l.bf16 %v163
  %v236 = vunpack.c.l.bf16 %v164
  %v237 = vunpack.c.l.bf16 %v165
  %v238 = vunpack.c.l.bf16 %v166
  %v239 = vunpack.c.l.bf16 %v167
  %v240 = vunpack.c.l.bf16 %v168
  %v241 = vunpack.c.l.bf16 %v169
  %v242 = vunpack.c.l.bf16 %v170
  %v243 = vunpack.c.l.bf16 %v171
  %v244 = vunpack.c.l.bf16 %v172
  %v245 = vunpack.c.l.bf16 %v173
  %v246 = vunpack.c.l.bf16 %v174
  %v247 = vunpack.c.l.bf16 %v175
  %v248 = vunpack.c.l.bf16 %v176
  %v249 = vunpack.c.l.bf16 %v177
  %v250 = vunpack.c.l.bf16 %v178
  %v251 = vunpack.c.l.bf16 %v179
  %v252 = vunpack.c.l.bf16 %v180
  %v253 = vunpack.c.l.bf16 %v181
  %v254 = vunpack.c.l.bf16 %v182
  %v255 = vunpack.c.l.bf16 %v183
  %v256 = vunpack.c.l.bf16 %v184
  %v257 = vunpack.c.l.bf16 %v185
  %v258 = vunpack.c.l.bf16 %v186
  %v259 = vunpack.c.l.bf16 %v187
  %v260 = vunpack.c.l.bf16 %v188
  %v261 = vunpack.c.l.bf16 %v189
  %v262 = vunpack.c.l.bf16 %v190
  %v263 = vunpack.c.l.bf16 %v191
  %v264 = vunpack.c.l.bf16 %v192
  %v265 = vunpack.c.l.bf16 %v193
  %v266 = vunpack.c.l.bf16 %v194
  %v267 = vunpack.c.l.bf16 %v195
  %v268 = vunpack.c.l.bf16 %v196
  %v269 = vunpack.c.l.bf16 %v197
  %v270 = vunpack.c.l.bf16 %v198
  %v273 = vcombine.high %v124, %v124
  %v275 = vunpack.c.l.s4 1983009808
  %v276 = vunpack.c.0.s8 %v275
  %v277 = vlaneseq
  %v278 = vshrl.u32 %v277, 7
  %v279 = vsub.s32 %v276, %v278
  %v280 = vrot.slane %v124, %v279
  %v282 = vunpack.c.l.s4 1983009808
  %v283 = vunpack.c.0.s8 %v282
  %v284 = vlaneseq
  %v285 = vshrl.u32 %v284, 7
  %v286 = vsub.s32 %v283, %v285
  %v287 = vrot.slane %v273, %v286
  %v288 = vcombine.high %v280, %v280
  %v289 = vcombine.high %v287, %v287
  %v291 = vunpack.c.l.s4 1983009808
  %v292 = vunpack.c.0.s8 %v291
  %v293 = vlaneseq
  %v294 = vshrl.u32 %v293, 7
  %v295 = vsub.s32 %v292, %v294
  %v296 = vrot.slane %v125, %v295
  %vm301 = vcmask 523264
  %v302 = vsel %vm301, %v296, 0
  %304 = vmatprep.subr.mxu0 0.0
  %305 = vmatpush1.msra.mxu0 %v199
  %306 = vmatprep.subr.mxu0 0.0
  %307 = vmatpush1.msra.mxu0 %v200
  %308 = vmatprep.subr.mxu0 0.0
  %309 = vmatpush1.msra.mxu0 %v201
  %310 = vmatprep.subr.mxu0 0.0
  %311 = vmatpush1.msra.mxu0 %v202
  %312 = vmatprep.subr.mxu0 0.0
  %313 = vmatpush1.msra.mxu0 %v203
  %314 = vmatprep.subr.mxu0 0.0
  %315 = vmatpush1.msra.mxu0 %v204
  %316 = vmatprep.subr.mxu0 0.0
  %317 = vmatpush1.msra.mxu0 %v205
  %318 = vmatprep.subr.mxu0 0.0
  %319 = vmatpush1.msra.mxu0 %v206
  %320 = vmatprep.subr.mxu0 0.0
  %321 = vmatpush1.msra.mxu0 %v207
  %322 = vmatprep.subr.mxu0 0.0
  %323 = vmatpush1.msra.mxu0 %v208
  %324 = vmatprep.subr.mxu0 0.0
  %325 = vmatpush1.msra.mxu0 %v209
  %326 = vmatprep.subr.mxu0 0.0
  %327 = vmatpush1.msra.mxu0 %v210
  %328 = vmatprep.subr.mxu0 0.0
  %329 = vmatpush1.msra.mxu0 %v211
  %330 = vmatprep.subr.mxu0 0.0
  %331 = vmatpush1.msra.mxu0 %v212
  %332 = vmatprep.subr.mxu0 0.0
  %333 = vmatpush1.msra.mxu0 %v213
  %334 = vmatprep.subr.mxu0 0.0
  %335 = vmatpush1.msra.mxu0 %v214
  %336 = vmatprep.subr.mxu0 0.0
  %337 = vmatpush1.msra.mxu0 %v215
  %338 = vmatprep.subr.mxu0 0.0
  %339 = vmatpush1.msra.mxu0 %v216
  %340 = vmatprep.subr.mxu0 0.0
  %341 = vmatpush1.msra.mxu0 %v217
  %342 = vmatprep.subr.mxu0 0.0
  %343 = vmatpush1.msra.mxu0 %v218
  %344 = vmatprep.subr.mxu0 0.0
  %345 = vmatpush1.msra.mxu0 %v219
  %346 = vmatprep.subr.mxu0 0.0
  %347 = vmatpush1.msra.mxu0 %v220
  %348 = vmatprep.subr.mxu0 0.0
  %349 = vmatpush1.msra.mxu0 %v221
  %350 = vmatprep.subr.mxu0 0.0
  %351 = vmatpush1.msra.mxu0 %v222
  %352 = vmatprep.subr.mxu0 0.0
  %353 = vmatpush1.msra.mxu0 %v223
  %354 = vmatprep.subr.mxu0 0.0
  %355 = vmatpush1.msra.mxu0 %v224
  %356 = vmatprep.subr.mxu0 0.0
  %357 = vmatpush1.msra.mxu0 %v225
  %358 = vmatprep.subr.mxu0 0.0
  %359 = vmatpush1.msra.mxu0 %v226
  %360 = vmatprep.subr.mxu0 0.0
  %361 = vmatpush1.msra.mxu0 %v227
  %362 = vmatprep.subr.mxu0 0.0
  %363 = vmatpush1.msra.mxu0 %v228
  %364 = vmatprep.subr.mxu0 0.0
  %365 = vmatpush1.msra.mxu0 %v229
  %366 = vmatprep.subr.mxu0 0.0
  %367 = vmatpush1.msra.mxu0 %v230
  %368 = vmatprep.mubr.f32.mxu0 %v288
  %369 = vmatmul.mubr.f32.gmra.mrb[0].mxu0 %v280
  %v370 = vpop.f32.mrb[0].mxu0
  %v371 = vadd.f32 0.0, %v370
  %v372 = vpop.f32.mrb[0].mxu0
  %373 = vdwg.mxu0
  %374 = vmatprep.subr.mxu0 0.0
  %375 = vmatpush1.msra.mxu0 %v231
  %376 = vmatprep.subr.mxu0 0.0
  %377 = vmatpush1.msra.mxu0 %v232
  %378 = vmatprep.subr.mxu0 0.0
  %379 = vmatpush1.msra.mxu0 %v233
  %380 = vmatprep.subr.mxu0 0.0
  %381 = vmatpush1.msra.mxu0 %v234
  %382 = vmatprep.subr.mxu0 0.0
  %383 = vmatpush1.msra.mxu0 %v235
  %384 = vmatprep.subr.mxu0 0.0
  %385 = vmatpush1.msra.mxu0 %v236
  %386 = vmatprep.subr.mxu0 0.0
  %387 = vmatpush1.msra.mxu0 %v237
  %388 = vmatprep.subr.mxu0 0.0
  %389 = vmatpush1.msra.mxu0 %v238
  %390 = vmatprep.subr.mxu0 0.0
  %391 = vmatpush1.msra.mxu0 %v239
  %392 = vmatprep.subr.mxu0 0.0
  %393 = vmatpush1.msra.mxu0 %v240
  %394 = vmatprep.subr.mxu0 0.0
  %395 = vmatpush1.msra.mxu0 %v241
  %396 = vmatprep.subr.mxu0 0.0
  %397 = vmatpush1.msra.mxu0 %v242
  %398 = vmatprep.subr.mxu0 0.0
  %399 = vmatpush1.msra.mxu0 %v243
  %400 = vmatprep.subr.mxu0 0.0
  %401 = vmatpush1.msra.mxu0 %v244
  %402 = vmatprep.subr.mxu0 0.0
  %403 = vmatpush1.msra.mxu0 %v245
  %404 = vmatprep.subr.mxu0 0.0
  %405 = vmatpush1.msra.mxu0 %v246
  %406 = vmatprep.subr.mxu0 0.0
  %407 = vmatpush1.msra.mxu0 %v247
  %408 = vmatprep.subr.mxu0 0.0
  %409 = vmatpush1.msra.mxu0 %v248
  %410 = vmatprep.subr.mxu0 0.0
  %411 = vmatpush1.msra.mxu0 %v249
  %412 = vmatprep.subr.mxu0 0.0
  %413 = vmatpush1.msra.mxu0 %v250
  %414 = vmatprep.subr.mxu0 0.0
  %415 = vmatpush1.msra.mxu0 %v251
  %416 = vmatprep.subr.mxu0 0.0
  %417 = vmatpush1.msra.mxu0 %v252
  %418 = vmatprep.subr.mxu0 0.0
  %419 = vmatpush1.msra.mxu0 %v253
  %420 = vmatprep.subr.mxu0 0.0
  %421 = vmatpush1.msra.mxu0 %v254
  %422 = vmatprep.subr.mxu0 0.0
  %423 = vmatpush1.msra.mxu0 %v255
  %424 = vmatprep.subr.mxu0 0.0
  %425 = vmatpush1.msra.mxu0 %v256
  %426 = vmatprep.subr.mxu0 0.0
  %427 = vmatpush1.msra.mxu0 %v257
  %428 = vmatprep.subr.mxu0 0.0
  %429 = vmatpush1.msra.mxu0 %v258
  %430 = vmatprep.subr.mxu0 0.0
  %431 = vmatpush1.msra.mxu0 %v259
  %432 = vmatprep.subr.mxu0 0.0
  %433 = vmatpush1.msra.mxu0 %v260
  %434 = vmatprep.subr.mxu0 0.0
  %435 = vmatpush1.msra.mxu0 %v261
  %436 = vmatprep.subr.mxu0 0.0
  %437 = vmatpush1.msra.mxu0 %v262
  %438 = vmatprep.mubr.f32.mxu0 %v289
  %439 = vmatmul.mubr.f32.gmra.mrb[0].mxu0 %v287
  %v440 = vpop.f32.mrb[0].mxu0
  %v441 = vadd.f32 %v371, %v440
  %v442 = vpop.f32.mrb[0].mxu0
  %443 = vdwg.mxu0
  %444 = vmatprep.subr.mxu0 0.0
  %445 = vmatpush1.msra.mxu0 %v263
  %446 = vmatprep.subr.mxu0 0.0
  %447 = vmatpush1.msra.mxu0 %v264
  %448 = vmatprep.subr.mxu0 0.0
  %449 = vmatpush1.msra.mxu0 %v265
  %450 = vmatprep.subr.mxu0 0.0
  %451 = vmatpush1.msra.mxu0 %v266
  %452 = vmatprep.subr.mxu0 0.0
  %453 = vmatpush1.msra.mxu0 %v267
  %454 = vmatprep.subr.mxu0 0.0
  %455 = vmatpush1.msra.mxu0 %v268
  %456 = vmatprep.subr.mxu0 0.0
  %457 = vmatpush1.msra.mxu0 %v269
  %458 = vmatprep.subr.mxu0 0.0
  %459 = vmatpush1.msra.mxu0 %v270
  %460 = vmatprep.subr.mxu0 0.0
  %461 = vmatpush1.msra.mxu0 0.0
  %462 = vmatprep.subr.mxu0 0.0
  %463 = vmatpush1.msra.mxu0 0.0
  %464 = vmatprep.subr.mxu0 0.0
  %465 = vmatpush1.msra.mxu0 0.0
  %466 = vmatprep.subr.mxu0 0.0
  %467 = vmatpush1.msra.mxu0 0.0
  %468 = vmatprep.subr.mxu0 0.0
  %469 = vmatpush1.msra.mxu0 0.0
  %470 = vmatprep.subr.mxu0 0.0
  %471 = vmatpush1.msra.mxu0 0.0
  %472 = vmatprep.subr.mxu0 0.0
  %473 = vmatpush1.msra.mxu0 0.0
  %474 = vmatprep.subr.mxu0 0.0
  %475 = vmatpush1.msra.mxu0 0.0
  %476 = vmatprep.subr.mxu0 0.0
  %477 = vmatpush1.msra.mxu0 0.0
  %478 = vmatprep.subr.mxu0 0.0
  %479 = vmatpush1.msra.mxu0 0.0
  %480 = vmatprep.subr.mxu0 0.0
  %481 = vmatpush1.msra.mxu0 0.0
  %482 = vmatprep.subr.mxu0 0.0
  %483 = vmatpush1.msra.mxu0 0.0
  %484 = vmatprep.subr.mxu0 0.0
  %485 = vmatpush1.msra.mxu0 0.0
  %486 = vmatprep.subr.mxu0 0.0
  %487 = vmatpush1.msra.mxu0 0.0
  %488 = vmatprep.subr.mxu0 0.0
  %489 = vmatpush1.msra.mxu0 0.0
  %490 = vmatprep.subr.mxu0 0.0
  %491 = vmatpush1.msra.mxu0 0.0
  %492 = vmatprep.subr.mxu0 0.0
  %493 = vmatpush1.msra.mxu0 0.0
  %494 = vmatprep.subr.mxu0 0.0
  %495 = vmatpush1.msra.mxu0 0.0
  %496 = vmatprep.subr.mxu0 0.0
  %497 = vmatpush1.msra.mxu0 0.0
  %498 = vmatprep.subr.mxu0 0.0
  %499 = vmatpush1.msra.mxu0 0.0
  %500 = vmatprep.subr.mxu0 0.0
  %501 = vmatpush1.msra.mxu0 0.0
  %502 = vmatprep.subr.mxu0 0.0
  %503 = vmatpush1.msra.mxu0 0.0
  %504 = vmatprep.subr.mxu0 0.0
  %505 = vmatpush1.msra.mxu0 0.0
  %506 = vmatprep.subr.mxu0 0.0
  %507 = vmatpush1.msra.mxu0 0.0
  %508 = vmatprep.mubr.f32.mxu0 0.0
  %509 = vmatmul.mubr.f32.gmra.mrb[0].mxu0 %v302
  %v510 = vpop.f32.mrb[0].mxu0
  %v511 = vadd.f32 %v441, %v510
  %v512 = vpop.f32.mrb[0].mxu0
  %513 = vdwg.mxu0
  %v514 = vadd.f32 %v126, %v511
  %vm515 = vcmask 320512
  %516 = vst.msk [vmem:[#allocation2] sm:$0x3] %vm515, %v514
  // Predicated region
  $region34: #{tpu_custom_call.1} parent=0 // pred_check
    %p517 = pneg %p28
  $region35: #{tpu_custom_call.1} parent=0 // pred_check_branch
    %519 = sbr.rel (%p517) target = $region37
  $region36: #{tpu_custom_call.1} parent=0 // pred_region
    %v520 = vld [vmem:[#allocation2] sm:$0x3]
    %v521 = vmax.f32 %v520, 0.0
    %v522 = vld [vmem:[%s5] sm:$0x1]
    %v524 = vlaneseq
    %v525 = vshrl.u32 %v524, 7
    %v526 = vsub.s32 0, %v525
    %v527 = vrot.slane %v522, %v526
    %v529 = vmul.f32 %v521, %v527
    %v530 = vsel %vm515, %v529, 0.0
    %531 = vadd.xlane.f32.xlu0 %v530
    %v532 = vpop.xlane.xlu0 %531
    %v533 = vld [vmem:[#allocation3] sm:$0x1]
    %v535 = vlaneseq
    %v536 = vshrl.u32 %v535, 7
    %v537 = vsub.s32 0, %v536
    %v538 = vrot.slane %v533, %v537
    %v540 = vadd.f32 %v532, %v538
    %vm541 = vcmask 1024
    %542 = vst.msk [vmem:[%s7] sm:$0x3] %vm541, %v540
  $region37: #{tpu_custom_call.1} parent=0 // pred_fallthru
    _
  // Predicated region
  $region38: #{tpu_custom_call.1} parent=0 // pred_check
    _
  $region39: #{tpu_custom_call.1} parent=0 // pred_check_branch
    %544 = sbr.rel (0) target = $region41
  $region40: #{tpu_custom_call.1} parent=0 // pred_region
    _
  $region41: #{tpu_custom_call.1} parent=0 // pred_fallthru
    _
  // Predicated region
  $region42: #{tpu_custom_call.1} parent=0 // pred_check
    _
  $region43: #{tpu_custom_call.1} parent=0 // pred_check_branch
    %546 = sbr.rel (0) target = $region45
  $region44: #{tpu_custom_call.1} parent=0 // pred_region
    _
  $region45: #{tpu_custom_call.1} parent=0 // pred_fallthru
    _

</llo_original>
